<compile_context>
chip_gen: v7x
topology: tpu7x:2x2x1
jax: 0.10.0
libtpu: 0.0.40
codegen_flags: <defaults>
</compile_context>

<pallas_src>
import functools

import jax
import jax.numpy as jnp
from jax import lax
from jax.experimental import pallas as pl
from jax.experimental.pallas import tpu as pltpu

_SUB = 256  # lane sub-tile kept register-resident inside the kernel (~50 vregs)


def mlp_kernel(x_ref,
               w1_ref, b1_ref,
               w2_ref, b2_ref,
               w3_ref, b3_ref,
               w4_ref, b4_ref,
               o_ref,
               *, sub_tile, n_sub):
    """Fused 4-layer MLP, feature-major layout (batch in the lane axis).

    x_ref : [D, T]     bf16
    wN    : [out, in]  bf16 (PyTorch layout)   bN : [out, 1] f32
    w4    : [32, 1]    f32  (final layer as VPU mult + XLU reduce)
    o_ref : [1, T]     f32  (lane-dense output)
    """
    # Hoist the (tiny, VMEM-resident) weights/biases out of the sub-tile loop.
    w1 = w1_ref[...]
    b1 = b1_ref[...]
    w2 = w2_ref[...]
    b2 = b2_ref[...]
    w3 = w3_ref[...]
    b3 = b3_ref[...]
    w4 = w4_ref[...]
    b4 = b4_ref[...]

    def body(t, carry):
        start = pl.multiple_of(t * sub_tile, sub_tile)
        xs = x_ref[:, pl.ds(start, sub_tile)]                     # [D, SUB] bf16

        # layer 1: [128, D] @ [D, SUB] -> [128, SUB]  (MXU, f32 accumulate)
        h = jnp.dot(w1, xs, preferred_element_type=jnp.float32) + b1
        h = jnp.maximum(h, 0.0).astype(jnp.bfloat16)

        # layer 2: [64, 128] @ [128, SUB] -> [64, SUB]
        h = jnp.dot(w2, h, preferred_element_type=jnp.float32) + b2
        h = jnp.maximum(h, 0.0).astype(jnp.bfloat16)

        # layer 3: [32, 64] @ [64, SUB] -> [32, SUB]
        h = jnp.dot(w3, h, preferred_element_type=jnp.float32) + b3
        h = jnp.maximum(h, 0.0)                                    # keep f32

        # output layer: avoid a 1-row MXU pass -> VPU multiply + XLU reduce.
        out = jnp.sum(h * w4, axis=0, keepdims=True) + b4          # [1, SUB]
        o_ref[:, pl.ds(start, sub_tile)] = out.astype(o_ref.dtype)
        return carry

    # Unrolled so the LLO scheduler sees the whole chain and keeps each
    # sub-tile's activations in vregs (no VMEM spill of [128,SUB] f32).
    lax.fori_loop(0, n_sub, body, 0, unroll=True)


def _round_up(x, m):
    return ((x + m - 1) // m) * m


def _num_tensorcores():
    """TensorCores per chip: 2 on v7x, 1 on v5e/v6e (best-effort detection)."""
    try:
        d = jax.devices()[0]
        if d.platform != "tpu":
            return 1
        kind = str(getattr(d, "device_kind", "")).lower()
        return 2 if "v7" in kind else 1
    except Exception:  # pragma: no cover - conservative fallback
        return 1


def regression_model_forward(x, params, *, batch_tile=None, num_cores=None):
    """Run the fused MLP Pallas kernel.

    x:      [B, D] float32 (PyTorch batch-major layout)
    params: dict with PyTorch-shaped weights wN [out, in] and biases bN [out]
    returns [B, 1] float32
    """
    B, D = x.shape
    if num_cores is None:
        num_cores = _num_tensorcores()

    # ---- tile-size selection (generation aware) ---------------------------
    # Scale the tile with B: ideally one tile per TensorCore, rounded to a
    # multiple of the 256-lane sub-tile, capped at 4096 lanes.  VMEM note:
    # in-kernel temporaries are per-sub-tile only (~0.3 MiB), the x block is
    # D*T*2 bytes double-buffered, so even T=8192 stays far under the 32 MiB
    # scoped limit (and under v7x's 64 MiB physical VMEM).
    if batch_tile is None:
        per_core = pl.cdiv(B, num_cores)
        batch_tile = min(4096, _round_up(max(per_core, _SUB), _SUB))
    else:
        batch_tile = _round_up(max(int(batch_tile), _SUB), _SUB)
    assert batch_tile % _SUB == 0

    num_tiles = pl.cdiv(B, batch_tile)
    if num_cores > 1:
        # v7x megacore: balance work across both TensorCores.
        num_tiles = _round_up(num_tiles, num_cores)
    B_pad = num_tiles * batch_tile

    # ---- wrapper-side layout plumbing (fused into the input DMA) ----------
    # Padded batch rows run through the bias/ReLU chain and produce nonzero
    # values, but they are sliced off before return: wasted work, not a bug.
    x_pad = jnp.pad(x, ((0, B_pad - B), (0, 0)))
    x_t = x_pad.T.astype(jnp.bfloat16)                     # [D, B_pad], batch in lanes

    w1 = params["w1"].astype(jnp.bfloat16)                 # [128, D]
    w2 = params["w2"].astype(jnp.bfloat16)                 # [64, 128]
    w3 = params["w3"].astype(jnp.bfloat16)                 # [32, 64]
    b1 = params["b1"].reshape(-1, 1)                       # [128, 1] f32
    b2 = params["b2"].reshape(-1, 1)                       # [64, 1]  f32
    b3 = params["b3"].reshape(-1, 1)                       # [32, 1]  f32
    w4 = params["w4"].reshape(-1, 1).astype(jnp.float32)   # [32, 1]  f32 (VPU path)
    b4 = params["b4"].reshape(1, 1)                        # [1, 1]   f32

    # Weights/biases: one full block each, constant index_map -> fetched once.
    def full(a):
        return pl.BlockSpec(a.shape, lambda i: (0, 0))

    flops = 2 * B_pad * (D * 128 + 128 * 64 + 64 * 32 + 32)
    weight_bytes = 2 * (128 * D + 64 * 128 + 32 * 64) + 4 * (128 + 64 + 32 + 32 + 1)
    bytes_accessed = B_pad * (D * 2 + 4) + weight_bytes
    cost = pl.CostEstimate(flops=flops, transcendentals=0,
                           bytes_accessed=bytes_accessed)

    kernel = functools.partial(mlp_kernel, sub_tile=_SUB, n_sub=batch_tile // _SUB)

    out = pl.pallas_call(
        kernel,
        out_shape=jax.ShapeDtypeStruct((1, B_pad), jnp.float32),
        grid_spec=pltpu.PrefetchScalarGridSpec(
            num_scalar_prefetch=0,
            grid=(num_tiles,),
            in_specs=[
                pl.BlockSpec((D, batch_tile), lambda i: (0, i)),   # x tile
                full(w1), full(b1),
                full(w2), full(b2),
                full(w3), full(b3),
                full(w4), full(b4),
            ],
            out_specs=pl.BlockSpec((1, batch_tile), lambda i: (0, i)),
        ),
        compiler_params=pltpu.CompilerParams(
            dimension_semantics=("parallel",),
            # 32 MiB scoped VMEM: safe on v7x (64 MiB physical) and generous
            # for tiles up to ~8K lanes on all generations.
            vmem_limit_bytes=32 * 1024 * 1024,
            # Let XLA fuse the pad/transpose/bf16-cast producer of x into the
            # pallas_call input feed (x is the only large operand).
            allow_input_fusion=[True] + [False] * 8,
        ),
        cost_estimate=cost,
    )(x_t, w1, b1, w2, b2, w3, b3, w4, b4)

    return out[:, :B].T                                    # back to PyTorch [B, 1]


def init_params(key, in_features):
    """Deterministic Kaiming-uniform-ish init mimicking nn.Linear defaults.

    Weights are stored in native PyTorch [out, in] layout; biases are 1-D [out].
    """
    dims = [(in_features, 128), (128, 64), (64, 32), (32, 1)]
    params = {}
    for idx, (fan_in, fan_out) in enumerate(dims, start=1):
        key, kw, kb = jax.random.split(key, 3)
        bound = 1.0 / jnp.sqrt(fan_in)
        params[f"w{idx}"] = jax.random.uniform(
            kw, (fan_out, fan_in), jnp.float32, -bound, bound)
        params[f"b{idx}"] = jax.random.uniform(
            kb, (fan_out,), jnp.float32, -bound, bound)
    return params


def reference_forward_bf16(x, params):
    """Plain-JAX reference matching the kernel's mixed-precision compute path.

    NOTE: the kernel casts x / weights to bf16 (f32 accumulation); a true f32
    PyTorch RegressionModel may differ by more than 1e-3 for large D or
    ill-conditioned weights.
    """
    xb = x.astype(jnp.bfloat16)
    w1 = params["w1"].astype(jnp.bfloat16)
    w2 = params["w2"].astype(jnp.bfloat16)
    w3 = params["w3"].astype(jnp.bfloat16)
    h = jnp.dot(xb, w1.T, preferred_element_type=jnp.float32) + params["b1"]
    h = jnp.maximum(h, 0.0).astype(jnp.bfloat16)
    h = jnp.dot(h, w2.T, preferred_element_type=jnp.float32) + params["b2"]
    h = jnp.maximum(h, 0.0).astype(jnp.bfloat16)
    h = jnp.dot(h, w3.T, preferred_element_type=jnp.float32) + params["b3"]
    h = jnp.maximum(h, 0.0)
    return h @ params["w4"].T + params["b4"]


if __name__ == "__main__":
    key = jax.random.PRNGKey(0)
    k_x, k_p = jax.random.split(key)

    B, D = 200, 16        # X_train.shape[1] == 16 features; B not a tile multiple
    x = jax.random.normal(k_x, (B, D), dtype=jnp.float32)
    params = init_params(k_p, D)

    fwd = jax.jit(lambda xx: regression_model_forward(xx, params))
    out = jax.block_until_ready(fwd(x))

    ref = reference_forward_bf16(x, params)
    assert out.shape == (B, 1)
    max_err = float(jnp.max(jnp.abs(out - ref)))
    assert jnp.allclose(out, ref, atol=1e-3, rtol=1e-3), (
        f"mismatch vs reference, max abs err = {max_err}")

    # Exercise the multi-tile grid path as well (explicit small tile).
    B2 = 600
    x2 = jax.random.normal(jax.random.PRNGKey(1), (B2, D), dtype=jnp.float32)
    out2 = jax.block_until_ready(
        regression_model_forward(x2, params, batch_tile=256))
    ref2 = reference_forward_bf16(x2, params)
    assert out2.shape == (B2, 1)
    assert jnp.allclose(out2, ref2, atol=1e-3, rtol=1e-3), (
        f"multi-tile mismatch, max abs err = "
        f"{float(jnp.max(jnp.abs(out2 - ref2)))}")

    print("KERNEL_OK")
</pallas_src>

<mosaic_0001>
module attributes {stable_mosaic.version = 11 : i64} {
  func.func @mlp_kernel(%arg0: i32, %arg1: memref<16x256xbf16, #tpu.memory_space<vmem>>, %arg2: memref<128x16xbf16, #tpu.memory_space<vmem>>, %arg3: memref<128x1xf32, #tpu.memory_space<vmem>>, %arg4: memref<64x128xbf16, #tpu.memory_space<vmem>>, %arg5: memref<64x1xf32, #tpu.memory_space<vmem>>, %arg6: memref<32x64xbf16, #tpu.memory_space<vmem>>, %arg7: memref<32x1xf32, #tpu.memory_space<vmem>>, %arg8: memref<32x1xf32, #tpu.memory_space<vmem>>, %arg9: memref<1x1xf32, #tpu.memory_space<vmem>>, %arg10: memref<1x256xf32, #tpu.memory_space<vmem>>) attributes {dimension_semantics = [#tpu.dimension_semantics<parallel>], iteration_bounds = array<i64: 1>, scalar_prefetch = 0 : i64, scratch_operands = 0 : i64, tpu.core_type = #tpu.core_type<tc>, window_params = [{transform_indices = @transform_0, window_bounds = array<i64: 16, 256>}, {pipeline_mode = #tpu.pipeline_mode<synchronous>, transform_indices = @transform_1, window_bounds = array<i64: 128, 16>}, {pipeline_mode = #tpu.pipeline_mode<synchronous>, transform_indices = @transform_2, window_bounds = array<i64: 128, 1>}, {pipeline_mode = #tpu.pipeline_mode<synchronous>, transform_indices = @transform_3, window_bounds = array<i64: 64, 128>}, {pipeline_mode = #tpu.pipeline_mode<synchronous>, transform_indices = @transform_4, window_bounds = array<i64: 64, 1>}, {pipeline_mode = #tpu.pipeline_mode<synchronous>, transform_indices = @transform_5, window_bounds = array<i64: 32, 64>}, {pipeline_mode = #tpu.pipeline_mode<synchronous>, transform_indices = @transform_6, window_bounds = array<i64: 32, 1>}, {pipeline_mode = #tpu.pipeline_mode<synchronous>, transform_indices = @transform_7, window_bounds = array<i64: 32, 1>}, {pipeline_mode = #tpu.pipeline_mode<synchronous>, transform_indices = @transform_8, window_bounds = array<i64: 1, 1>}, {transform_indices = @transform_9, window_bounds = array<i64: 1, 256>}]} {
    %c0 = arith.constant 0 : index
    %c0_0 = arith.constant 0 : index
    %0 = vector.load %arg2[%c0, %c0_0] : memref<128x16xbf16, #tpu.memory_space<vmem>>, vector<128x16xbf16>
    %c0_1 = arith.constant 0 : index
    %c0_2 = arith.constant 0 : index
    %1 = vector.load %arg3[%c0_1, %c0_2] : memref<128x1xf32, #tpu.memory_space<vmem>>, vector<128x1xf32>
    %c0_3 = arith.constant 0 : index
    %c0_4 = arith.constant 0 : index
    %2 = vector.load %arg4[%c0_3, %c0_4] : memref<64x128xbf16, #tpu.memory_space<vmem>>, vector<64x128xbf16>
    %c0_5 = arith.constant 0 : index
    %c0_6 = arith.constant 0 : index
    %3 = vector.load %arg5[%c0_5, %c0_6] : memref<64x1xf32, #tpu.memory_space<vmem>>, vector<64x1xf32>
    %c0_7 = arith.constant 0 : index
    %c0_8 = arith.constant 0 : index
    %4 = vector.load %arg6[%c0_7, %c0_8] : memref<32x64xbf16, #tpu.memory_space<vmem>>, vector<32x64xbf16>
    %c0_9 = arith.constant 0 : index
    %c0_10 = arith.constant 0 : index
    %5 = vector.load %arg7[%c0_9, %c0_10] : memref<32x1xf32, #tpu.memory_space<vmem>>, vector<32x1xf32>
    %c0_11 = arith.constant 0 : index
    %c0_12 = arith.constant 0 : index
    %6 = vector.load %arg8[%c0_11, %c0_12] : memref<32x1xf32, #tpu.memory_space<vmem>>, vector<32x1xf32>
    %c0_13 = arith.constant 0 : index
    %c0_14 = arith.constant 0 : index
    %7 = vector.load %arg9[%c0_13, %c0_14] : memref<1x1xf32, #tpu.memory_space<vmem>>, vector<1x1xf32>
    %c0_i32 = arith.constant 0 : i32
    %c256_i32 = arith.constant 256 : i32
    %8 = arith.muli %c0_i32, %c256_i32 : i32
    %9 = tpu.assume_multiple %8, 256 : i32
    %c0_15 = arith.constant 0 : index
    %10 = arith.index_cast %9 : i32 to index
    %11 = vector.load %arg1[%c0_15, %10] : memref<16x256xbf16, #tpu.memory_space<vmem>>, vector<16x256xbf16>
    %cst = arith.constant dense<0.000000e+00> : vector<128x256xf32>
    %12 = tpu.matmul %0, %11, %cst {dimension_numbers = #tpu.dot_dimension_numbers<[1], [0], [0], [1], [0, 0, 1, 1], [], []>} : vector<128x16xbf16>, vector<16x256xbf16>, vector<128x256xf32> -> vector<128x256xf32>
    %13 = vector.broadcast %1 : vector<128x1xf32> to vector<128x256xf32>
    %14 = arith.addf %12, %13 : vector<128x256xf32>
    %cst_16 = arith.constant 0.000000e+00 : f32
    %15 = vector.broadcast %cst_16 : f32 to vector<128x256xf32>
    %16 = arith.maximumf %14, %15 : vector<128x256xf32>
    %17 = arith.truncf %16 : vector<128x256xf32> to vector<128x256xbf16>
    %cst_17 = arith.constant dense<0.000000e+00> : vector<64x256xf32>
    %18 = tpu.matmul %2, %17, %cst_17 {dimension_numbers = #tpu.dot_dimension_numbers<[1], [0], [0], [1], [0, 0, 1, 1], [], []>} : vector<64x128xbf16>, vector<128x256xbf16>, vector<64x256xf32> -> vector<64x256xf32>
    %19 = vector.broadcast %3 : vector<64x1xf32> to vector<64x256xf32>
    %20 = arith.addf %18, %19 : vector<64x256xf32>
    %cst_18 = arith.constant 0.000000e+00 : f32
    %21 = vector.broadcast %cst_18 : f32 to vector<64x256xf32>
    %22 = arith.maximumf %20, %21 : vector<64x256xf32>
    %23 = arith.truncf %22 : vector<64x256xf32> to vector<64x256xbf16>
    %cst_19 = arith.constant dense<0.000000e+00> : vector<32x256xf32>
    %24 = tpu.matmul %4, %23, %cst_19 {dimension_numbers = #tpu.dot_dimension_numbers<[1], [0], [0], [1], [0, 0, 1, 1], [], []>} : vector<32x64xbf16>, vector<64x256xbf16>, vector<32x256xf32> -> vector<32x256xf32>
    %25 = vector.broadcast %5 : vector<32x1xf32> to vector<32x256xf32>
    %26 = arith.addf %24, %25 : vector<32x256xf32>
    %cst_20 = arith.constant 0.000000e+00 : f32
    %27 = vector.broadcast %cst_20 : f32 to vector<32x256xf32>
    %28 = arith.maximumf %26, %27 : vector<32x256xf32>
    %29 = vector.broadcast %6 : vector<32x1xf32> to vector<32x256xf32>
    %30 = arith.mulf %28, %29 : vector<32x256xf32>
    %cst_21 = arith.constant dense<0.000000e+00> : vector<256xf32>
    %31 = vector.multi_reduction <add>, %30, %cst_21 [0] : vector<32x256xf32> to vector<256xf32>
    %32 = vector.shape_cast %31 : vector<256xf32> to vector<1x256xf32>
    %33 = vector.broadcast %7 : vector<1x1xf32> to vector<1x256xf32>
    %34 = arith.addf %32, %33 : vector<1x256xf32>
    %c0_22 = arith.constant 0 : index
    %35 = arith.index_cast %9 : i32 to index
    %36 = vector.load %arg10[%c0_22, %35] : memref<1x256xf32, #tpu.memory_space<vmem>>, vector<1x256xf32>
    tpu.vector_store %arg10[%c0_22, %35], %34 {strides = array<i32>} : memref<1x256xf32, #tpu.memory_space<vmem>>, vector<1x256xf32>,
    %c1_i32 = arith.constant 1 : i32
    return
  }
  func.func @transform_0(%arg0: i32) -> (i32, i32) {
    %c0_i32 = arith.constant 0 : i32
    %c0_i32_0 = arith.constant 0 : i32
    return %c0_i32, %arg0 : i32, i32
  }
  func.func @transform_1(%arg0: i32) -> (i32, i32) {
    %c0_i32 = arith.constant 0 : i32
    %c0_i32_0 = arith.constant 0 : i32
    %c0_i32_1 = arith.constant 0 : i32
    return %c0_i32, %c0_i32_0 : i32, i32
  }
  func.func @transform_2(%arg0: i32) -> (i32, i32) {
    %c0_i32 = arith.constant 0 : i32
    %c0_i32_0 = arith.constant 0 : i32
    %c0_i32_1 = arith.constant 0 : i32
    return %c0_i32, %c0_i32_0 : i32, i32
  }
  func.func @transform_3(%arg0: i32) -> (i32, i32) {
    %c0_i32 = arith.constant 0 : i32
    %c0_i32_0 = arith.constant 0 : i32
    %c0_i32_1 = arith.constant 0 : i32
    return %c0_i32, %c0_i32_0 : i32, i32
  }
  func.func @transform_4(%arg0: i32) -> (i32, i32) {
    %c0_i32 = arith.constant 0 : i32
    %c0_i32_0 = arith.constant 0 : i32
    %c0_i32_1 = arith.constant 0 : i32
    return %c0_i32, %c0_i32_0 : i32, i32
  }
  func.func @transform_5(%arg0: i32) -> (i32, i32) {
    %c0_i32 = arith.constant 0 : i32
    %c0_i32_0 = arith.constant 0 : i32
    %c0_i32_1 = arith.constant 0 : i32
    return %c0_i32, %c0_i32_0 : i32, i32
  }
  func.func @transform_6(%arg0: i32) -> (i32, i32) {
    %c0_i32 = arith.constant 0 : i32
    %c0_i32_0 = arith.constant 0 : i32
    %c0_i32_1 = arith.constant 0 : i32
    return %c0_i32, %c0_i32_0 : i32, i32
  }
  func.func @transform_7(%arg0: i32) -> (i32, i32) {
    %c0_i32 = arith.constant 0 : i32
    %c0_i32_0 = arith.constant 0 : i32
    %c0_i32_1 = arith.constant 0 : i32
    return %c0_i32, %c0_i32_0 : i32, i32
  }
  func.func @transform_8(%arg0: i32) -> (i32, i32) {
    %c0_i32 = arith.constant 0 : i32
    %c0_i32_0 = arith.constant 0 : i32
    %c0_i32_1 = arith.constant 0 : i32
    return %c0_i32, %c0_i32_0 : i32, i32
  }
  func.func @transform_9(%arg0: i32) -> (i32, i32) {
    %c0_i32 = arith.constant 0 : i32
    %c0_i32_0 = arith.constant 0 : i32
    return %c0_i32, %arg0 : i32, i32
  }
}

</mosaic_0001>

<llo_original>
// kernel: _lambda_.2
$region0: #{_lambda_.2}
  #allocation0 [shape = 'u32[]', space=smem, size = 0x4, offset = 0x4, fixed_abs, tag = 'smem constant byte address 0x4 - core index']
  #allocation1 [shape = 'u32[144,128]{1,0:T(1,128)}', space=vmem, size = 0x12000, scoped, tag = 'internal scratch']
  #allocation2 [shape = 'u32[2048]{0}', space=vmem, size = 0x2000, scoped, tag = 'scoped memory for _lambda_.2']
  #allocation3 [shape = 'u32[2048]{0}', space=vmem, size = 0x2000, scoped, tag = 'scoped memory for _lambda_.2']
  #allocation4 [shape = 'u32[2048]{0}', space=vmem, size = 0x2000, scoped, tag = 'scoped memory for _lambda_.2']
  #allocation5 [shape = 'u32[2048]{0}', space=vmem, size = 0x2000, scoped, tag = 'scoped memory for _lambda_.2']
  #allocation6 [shape = 'u32[2048]{0}', space=vmem, size = 0x2000, scoped, tag = 'scoped memory for _lambda_.2']
  #allocation7 [shape = 'f32[1,1]{1,0:T(1,128)S(1)}', space=vmem, size = 0x200, scoped, tag = 'scoped memory for _lambda_.2']
  %s0 = inlined_call_operand.vmem [shape: bf16[128,16], index: 0, kind: input, shape index: {}]
  %s1 = inlined_call_operand.hbm [shape: f32[128,1], index: 1, kind: input, shape index: {}]
  %s2 = inlined_call_operand.hbm [shape: bf16[64,128], index: 2, kind: input, shape index: {}]
  %s3 = inlined_call_operand.hbm [shape: f32[64,1], index: 3, kind: input, shape index: {}]
  %s4 = inlined_call_operand.hbm [shape: bf16[32,64], index: 4, kind: input, shape index: {}]
  %s5 = inlined_call_operand.hbm [shape: f32[32,1], index: 5, kind: input, shape index: {}]
  %s6 = inlined_call_operand.hbm [shape: f32[32,1], index: 6, kind: input, shape index: {}]
  %s7 = inlined_call_operand.<no memory space> [shape: f32[1,1], index: 7, kind: input, shape index: {}]
  %s8 = inlined_call_operand.vmem [shape: bf16[200,16], index: 8, kind: input, shape index: {}]
  %s9 = inlined_call_operand.<no memory space> [shape: bf16[], index: 9, kind: input, shape index: {}]
  %s10 = inlined_call_operand.vmem [shape: f32[1,256], index: 10, kind: output, shape index: {}]
  %s11 = sld [smem:[#allocation0]]
  $region70: #{_lambda_.2} parent=0
    _
  %s13 = ssub.s32 1, %s11
  %s14 = scalar_select 0, %s13, %s11
  %v15 = vstv %s9
  %v16 = vunpack.i.l.bf16 %v15
  %v18 = vunpack.i.h.bf16 %v15
  %v20 = vstv %s7
  %21 = vst [vmem:[#allocation7] sm:$0x1] %v20
  $region1: #{_lambda_.2} parent=0
    #allocation8 [shape = 'u8[65536]{0}', space=vmem, size = 0x10000, scoped, tag = 'input window, operand 2, single buffered']
    #allocation9 [shape = 's32[1]{0}', space=sflag, size = 0x4, scoped, tag = 'scoped memory for _lambda_.2']
    #allocation10 [shape = 'u8[16384]{0}', space=vmem, size = 0x4000, scoped, tag = 'input window, operand 3, single buffered']
    #allocation11 [shape = 's32[1]{0}', space=sflag, size = 0x4, scoped, tag = 'scoped memory for _lambda_.2']
    #allocation12 [shape = 'u8[32768]{0}', space=vmem, size = 0x8000, scoped, tag = 'input window, operand 4, single buffered']
    #allocation13 [shape = 'u8[8192]{0}', space=vmem, size = 0x2000, scoped, tag = 'input window, operand 5, single buffered']
    #allocation14 [shape = 's32[1]{0}', space=sflag, size = 0x4, scoped, tag = 'scoped memory for _lambda_.2']
    #allocation15 [shape = 'u8[16384]{0}', space=vmem, size = 0x4000, scoped, tag = 'input window, operand 6, single buffered']
    #allocation16 [shape = 'u8[16384]{0}', space=vmem, size = 0x4000, scoped, tag = 'input window, operand 7, single buffered']
    #allocation17 [shape = 's32[1]{0}', space=sflag, size = 0x4, scoped, tag = 'scoped memory for _lambda_.2']
    #allocation18 [shape = 'u8[8192]{0}', space=vmem, size = 0x2000, dematerialized = true, scoped, tag = 'FusionAdapter Buffer %fusion.1 = bf16[16,256]{1,0:T(8,128)(2,1)} fusion(%param_8.2, %param_9), kind=kLoop, calls=%fused_computation.1.clone, metadata={op_name="jit(<lambda>)/convert_element_type" stack_frame_id=10}']
    %22 = vsyncpa [#allocation9], 0
    %23 = vsyncpa [#allocation11], 0
    %24 = vsyncpa [#allocation14], 0
    %25 = vsyncpa [#allocation17], 0
    // Predicated region
    $region2: #{_lambda_.2} parent=1 // pred_check
      _
    $region3: #{_lambda_.2} parent=1 // pred_check_branch
      %27 = sbr.rel (0) target = $region5
    $region4: #{_lambda_.2} parent=1 // pred_region
      _
    $region5: #{_lambda_.2} parent=1 // pred_fallthru
      _
    // Predicated region
    $region6: #{_lambda_.2} parent=1 // pred_check
      _
    $region7: #{_lambda_.2} parent=1 // pred_check_branch
      %29 = sbr.rel (0) target = $region9
    $region8: #{_lambda_.2} parent=1 // pred_region
      _
    $region9: #{_lambda_.2} parent=1 // pred_fallthru
      _
    // Predicated region
    $region10: #{_lambda_.2} parent=1 // pred_check
      _
    $region11: #{_lambda_.2} parent=1 // pred_check_branch
      %31 = sbr.rel (0) target = $region13
    $region12: #{_lambda_.2} parent=1 // pred_region
      %s33 = ssub.s32 2048, 2048
      %34 = vsyncadd [#allocation9], %s33
      %s35 = sshll.u32 [#allocation8], 4
      %s36 = int_to_ptr.vmem [resolvable:$true] %s35
      %41 = dma.hbm_to_vmem [thread:$0]  %s1, 2048, %s36, [#allocation9], 128, 128, 8
    $region13: #{_lambda_.2} parent=1 // pred_fallthru
      _
    // Predicated region
    $region14: #{_lambda_.2} parent=1 // pred_check
      _
    $region15: #{_lambda_.2} parent=1 // pred_check_branch
      %43 = sbr.rel (0) target = $region17
    $region16: #{_lambda_.2} parent=1 // pred_region
      %s45 = ssub.s32 512, 512
      %46 = vsyncadd [#allocation11], %s45
      %s47 = sshll.u32 [#allocation10], 4
      %s48 = int_to_ptr.vmem [resolvable:$true] %s47
      %53 = dma.hbm_to_vmem [thread:$0]  %s2, 512, %s48, [#allocation11], 128, 128, 8
    $region17: #{_lambda_.2} parent=1 // pred_fallthru
      _
    // Predicated region
    $region18: #{_lambda_.2} parent=1 // pred_check
      _
    $region19: #{_lambda_.2} parent=1 // pred_check_branch
      %55 = sbr.rel (0) target = $region21
    $region20: #{_lambda_.2} parent=1 // pred_region
      %s57 = ssub.s32 1024, 1024
      %58 = vsyncadd [#allocation11], %s57
      %s59 = sshll.u32 [#allocation12], 4
      %s60 = int_to_ptr.vmem [resolvable:$true] %s59
      %65 = dma.hbm_to_vmem [thread:$0]  %s3, 1024, %s60, [#allocation11], 128, 128, 8
    $region21: #{_lambda_.2} parent=1 // pred_fallthru
      _
    // Predicated region
    $region22: #{_lambda_.2} parent=1 // pred_check
      _
    $region23: #{_lambda_.2} parent=1 // pred_check_branch
      %67 = sbr.rel (0) target = $region25
    $region24: #{_lambda_.2} parent=1 // pred_region
      %s69 = ssub.s32 256, 256
      %70 = vsyncadd [#allocation14], %s69
      %s71 = sshll.u32 [#allocation13], 4
      %s72 = int_to_ptr.vmem [resolvable:$true] %s71
      %77 = dma.hbm_to_vmem [thread:$0]  %s4, 256, %s72, [#allocation14], 128, 128, 8
    $region25: #{_lambda_.2} parent=1 // pred_fallthru
      _
    // Predicated region
    $region26: #{_lambda_.2} parent=1 // pred_check
      _
    $region27: #{_lambda_.2} parent=1 // pred_check_branch
      %79 = sbr.rel (0) target = $region29
    $region28: #{_lambda_.2} parent=1 // pred_region
      %s81 = ssub.s32 512, 512
      %82 = vsyncadd [#allocation14], %s81
      %s83 = sshll.u32 [#allocation15], 4
      %s84 = int_to_ptr.vmem [resolvable:$true] %s83
      %89 = dma.hbm_to_vmem [thread:$0]  %s5, 512, %s84, [#allocation14], 128, 128, 8
    $region29: #{_lambda_.2} parent=1 // pred_fallthru
      _
    // Predicated region
    $region30: #{_lambda_.2} parent=1 // pred_check
      _
    $region31: #{_lambda_.2} parent=1 // pred_check_branch
      %91 = sbr.rel (0) target = $region33
    $region32: #{_lambda_.2} parent=1 // pred_region
      %s93 = ssub.s32 512, 512
      %94 = vsyncadd [#allocation17], %s93
      %s95 = sshll.u32 [#allocation16], 4
      %s96 = int_to_ptr.vmem [resolvable:$true] %s95
      %101 = dma.hbm_to_vmem [thread:$0]  %s6, 512, %s96, [#allocation17], 128, 128, 8
    $region33: #{_lambda_.2} parent=1 // pred_fallthru
      _
    // Predicated region
    $region34: #{_lambda_.2} parent=1 // pred_check
      _
    $region35: #{_lambda_.2} parent=1 // pred_check_branch
      %103 = sbr.rel (0) target = $region37
    $region36: #{_lambda_.2} parent=1 // pred_region
      _
    $region37: #{_lambda_.2} parent=1 // pred_fallthru
      _
    // Predicated region
    $region38: #{_lambda_.2} parent=1 // pred_check
      _
    $region39: #{_lambda_.2} parent=1 // pred_check_branch
      %105 = sbr.rel (0) target = $region41
    $region40: #{_lambda_.2} parent=1 // pred_region
      %106 = dma.done [#allocation9], 2048
    $region41: #{_lambda_.2} parent=1 // pred_fallthru
      _
    // Predicated region
    $region42: #{_lambda_.2} parent=1 // pred_check
      _
    $region43: #{_lambda_.2} parent=1 // pred_check_branch
      %108 = sbr.rel (0) target = $region45
    $region44: #{_lambda_.2} parent=1 // pred_region
      %109 = dma.done [#allocation11], 512
    $region45: #{_lambda_.2} parent=1 // pred_fallthru
      _
    // Predicated region
    $region46: #{_lambda_.2} parent=1 // pred_check
      _
    $region47: #{_lambda_.2} parent=1 // pred_check_branch
      %111 = sbr.rel (0) target = $region49
    $region48: #{_lambda_.2} parent=1 // pred_region
      %112 = dma.done [#allocation11], 1024
    $region49: #{_lambda_.2} parent=1 // pred_fallthru
      _
    // Predicated region
    $region50: #{_lambda_.2} parent=1 // pred_check
      _
    $region51: #{_lambda_.2} parent=1 // pred_check_branch
      %114 = sbr.rel (0) target = $region53
    $region52: #{_lambda_.2} parent=1 // pred_region
      %115 = dma.done [#allocation14], 256
    $region53: #{_lambda_.2} parent=1 // pred_fallthru
      _
    // Predicated region
    $region54: #{_lambda_.2} parent=1 // pred_check
      _
    $region55: #{_lambda_.2} parent=1 // pred_check_branch
      %117 = sbr.rel (0) target = $region57
    $region56: #{_lambda_.2} parent=1 // pred_region
      %118 = dma.done [#allocation14], 512
    $region57: #{_lambda_.2} parent=1 // pred_fallthru
      _
    // Predicated region
    $region58: #{_lambda_.2} parent=1 // pred_check
      _
    $region59: #{_lambda_.2} parent=1 // pred_check_branch
      %120 = sbr.rel (0) target = $region61
    $region60: #{_lambda_.2} parent=1 // pred_region
      %121 = dma.done [#allocation17], 512
    $region61: #{_lambda_.2} parent=1 // pred_fallthru
      _
    %v122 = vld [vmem:[%s8] sm:$0xf]
    %v123 = vunpack.c.l.bf16 %v122
    %v124 = vunpack.c.h.bf16 %v122
    %v125 = vlaneseq
    %v126 = vand.u32 %v125, 127
    %vm128 = vcmp.lt.s32.totalorder %v126, 200
    %v129 = vsel %vm128, %v123, %v16
    %v130 = vpack.c.bf16 0.0, %v129
    %132 = vst [vmem:[#allocation18] sm:$0xf] %v130
    %s133 = scalar_lea.vmem %s8, 4
    %s135 = sor.u32 255, 127
    %s136 = sand.u32 %s135, 85
    %s137 = sshrl.u32 %s136, 1
    %s138 = sor.u32 %s136, %s137
    %s139 = sand.u32 51, %s138
    %s140 = sshrl.u32 %s139, 2
    %s141 = sor.u32 %s139, %s140
    %s142 = sand.u32 15, %s141
    %v143 = vld [vmem:[%s133] sm:%s142]
    %v144 = vunpack.c.l.bf16 %v143
    %v145 = vunpack.c.h.bf16 %v143
    %v146 = vlaneseq
    %v147 = vand.u32 %v146, 127
    %v148 = vadd.s32 %v147, 128
    %vm149 = vcmp.lt.s32.totalorder %v148, 200
    %v150 = vsel %vm149, %v144, %v16
    %s151 = scalar_lea.vmem [#allocation18], 4
    %v152 = vpack.c.bf16 0.0, %v150
    %154 = vst [vmem:[%s151] sm:$0xf] %v152
    %s155 = scalar_lea.vmem %s8, 8
    %v156 = vld [vmem:[%s155] sm:$0xf]
    %v157 = vunpack.c.l.bf16 %v156
    %v158 = vunpack.c.h.bf16 %v156
    %v159 = vlaneseq
    %v160 = vand.u32 %v159, 127
    %vm162 = vcmp.lt.s32.totalorder %v160, 200
    %v163 = vsel %vm162, %v157, %v16
    %s164 = scalar_lea.vmem [#allocation18], 8
    %v165 = vpack.c.bf16 0.0, %v163
    %167 = vst [vmem:[%s164] sm:$0xf] %v165
    %s168 = scalar_lea.vmem %s8, 12
    %s170 = sor.u32 255, 127
    %s171 = sand.u32 %s170, 85
    %s172 = sshrl.u32 %s171, 1
    %s173 = sor.u32 %s171, %s172
    %s174 = sand.u32 51, %s173
    %s175 = sshrl.u32 %s174, 2
    %s176 = sor.u32 %s174, %s175
    %s177 = sand.u32 15, %s176
    %v178 = vld [vmem:[%s168] sm:%s177]
    %v179 = vunpack.c.l.bf16 %v178
    %v180 = vunpack.c.h.bf16 %v178
    %v181 = vlaneseq
    %v182 = vand.u32 %v181, 127
    %v183 = vadd.s32 %v182, 128
    %vm184 = vcmp.lt.s32.totalorder %v183, 200
    %v185 = vsel %vm184, %v179, %v16
    %s186 = scalar_lea.vmem [#allocation18], 12
    %v187 = vpack.c.bf16 0.0, %v185
    %189 = vst [vmem:[%s186] sm:$0xf] %v187
    %v191 = vld [vmem:[%s0] sm:$0xff]
    %v192 = vld [vmem:[%s0 + $0x8] sm:$0xff]
    %v193 = vld [vmem:[%s0 + $0x10] sm:$0xff]
    %v194 = vld [vmem:[%s0 + $0x18] sm:$0xff]
    %v195 = vld [vmem:[%s0 + $0x20] sm:$0xff]
    %v196 = vld [vmem:[%s0 + $0x28] sm:$0xff]
    %v197 = vld [vmem:[%s0 + $0x30] sm:$0xff]
    %v198 = vld [vmem:[%s0 + $0x38] sm:$0xff]
    %v199 = vld [vmem:[#allocation8] sm:$0xff]
    %v200 = vld [vmem:[#allocation8 + $0x8] sm:$0xff]
    %v201 = vld [vmem:[#allocation8 + $0x10] sm:$0xff]
    %v202 = vld [vmem:[#allocation8 + $0x18] sm:$0xff]
    %v203 = vld [vmem:[#allocation8 + $0x20] sm:$0xff]
    %v204 = vld [vmem:[#allocation8 + $0x28] sm:$0xff]
    %v205 = vld [vmem:[#allocation8 + $0x30] sm:$0xff]
    %v206 = vld [vmem:[#allocation8 + $0x38] sm:$0xff]
    %v207 = vld [vmem:[#allocation8 + $0x40] sm:$0xff]
    %v208 = vld [vmem:[#allocation8 + $0x48] sm:$0xff]
    %v209 = vld [vmem:[#allocation8 + $0x50] sm:$0xff]
    %v210 = vld [vmem:[#allocation8 + $0x58] sm:$0xff]
    %v211 = vld [vmem:[#allocation8 + $0x60] sm:$0xff]
    %v212 = vld [vmem:[#allocation8 + $0x68] sm:$0xff]
    %v213 = vld [vmem:[#allocation8 + $0x70] sm:$0xff]
    %v214 = vld [vmem:[#allocation8 + $0x78] sm:$0xff]
    %v215 = vld [vmem:[#allocation10] sm:$0xff]
    %v216 = vld [vmem:[#allocation10 + $0x8] sm:$0xff]
    %v217 = vld [vmem:[#allocation10 + $0x10] sm:$0xff]
    %v218 = vld [vmem:[#allocation10 + $0x18] sm:$0xff]
    %v219 = vld [vmem:[#allocation12] sm:$0xff]
    %v220 = vld [vmem:[#allocation12 + $0x8] sm:$0xff]
    %v221 = vld [vmem:[#allocation12 + $0x10] sm:$0xff]
    %v222 = vld [vmem:[#allocation12 + $0x18] sm:$0xff]
    %v223 = vld [vmem:[#allocation12 + $0x20] sm:$0xff]
    %v224 = vld [vmem:[#allocation12 + $0x28] sm:$0xff]
    %v225 = vld [vmem:[#allocation12 + $0x30] sm:$0xff]
    %v226 = vld [vmem:[#allocation12 + $0x38] sm:$0xff]
    %v227 = vld [vmem:[#allocation13] sm:$0xff]
    %v228 = vld [vmem:[#allocation13 + $0x8] sm:$0xff]
    %v229 = vld [vmem:[#allocation15] sm:$0xff]
    %v230 = vld [vmem:[#allocation15 + $0x8] sm:$0xff]
    %v231 = vld [vmem:[#allocation15 + $0x10] sm:$0xff]
    %v232 = vld [vmem:[#allocation15 + $0x18] sm:$0xff]
    %v233 = vld [vmem:[#allocation16] sm:$0xff]
    %v234 = vld [vmem:[#allocation16 + $0x8] sm:$0xff]
    %v235 = vld [vmem:[#allocation16 + $0x10] sm:$0xff]
    %v236 = vld [vmem:[#allocation16 + $0x18] sm:$0xff]
    %v237 = vld [vmem:[#allocation7] sm:$0x1]
    %v238 = vld [vmem:[#allocation18] sm:$0xff]
    %v239 = vld [vmem:[#allocation18 + $0x8] sm:$0xff]
    %241 = vset.pattern.permute.xlu0 0
    %242 = vperm.xlu0 %241, %v199
    %v243 = vpop.permute.xlu0 %242
    %246 = vset.pattern.permute.xlu0 0
    %247 = vperm.xlu0 %246, %v200
    %v248 = vpop.permute.xlu0 %247
    %251 = vset.pattern.permute.xlu0 0
    %252 = vperm.xlu0 %251, %v201
    %v253 = vpop.permute.xlu0 %252
    %256 = vset.pattern.permute.xlu0 0
    %257 = vperm.xlu0 %256, %v202
    %v258 = vpop.permute.xlu0 %257
    %261 = vset.pattern.permute.xlu0 0
    %262 = vperm.xlu0 %261, %v203
    %v263 = vpop.permute.xlu0 %262
    %266 = vset.pattern.permute.xlu0 0
    %267 = vperm.xlu0 %266, %v204
    %v268 = vpop.permute.xlu0 %267
    %271 = vset.pattern.permute.xlu0 0
    %272 = vperm.xlu0 %271, %v205
    %v273 = vpop.permute.xlu0 %272
    %276 = vset.pattern.permute.xlu0 0
    %277 = vperm.xlu0 %276, %v206
    %v278 = vpop.permute.xlu0 %277
    %281 = vset.pattern.permute.xlu0 0
    %282 = vperm.xlu0 %281, %v207
    %v283 = vpop.permute.xlu0 %282
    %286 = vset.pattern.permute.xlu0 0
    %287 = vperm.xlu0 %286, %v208
    %v288 = vpop.permute.xlu0 %287
    %291 = vset.pattern.permute.xlu0 0
    %292 = vperm.xlu0 %291, %v209
    %v293 = vpop.permute.xlu0 %292
    %296 = vset.pattern.permute.xlu0 0
    %297 = vperm.xlu0 %296, %v210
    %v298 = vpop.permute.xlu0 %297
    %301 = vset.pattern.permute.xlu0 0
    %302 = vperm.xlu0 %301, %v211
    %v303 = vpop.permute.xlu0 %302
    %306 = vset.pattern.permute.xlu0 0
    %307 = vperm.xlu0 %306, %v212
    %v308 = vpop.permute.xlu0 %307
    %311 = vset.pattern.permute.xlu0 0
    %312 = vperm.xlu0 %311, %v213
    %v313 = vpop.permute.xlu0 %312
    %316 = vset.pattern.permute.xlu0 0
    %317 = vperm.xlu0 %316, %v214
    %v318 = vpop.permute.xlu0 %317
    %v322 = vunpack.c.l.b16 %v238
    %v323 = vunpack.c.h.b16 %v238
    %v324 = vunpack.c.l.b16 %v239
    %v325 = vunpack.c.h.b16 %v239
    %v326 = vpack.c.b16 %v324, %v322
    %v327 = vpack.c.b16 %v325, %v323
    %vm330 = vcmask 130048
    %v332 = vsel %vm330, %v191, 0
    %v335 = vsel %vm330, %v192, 0
    %v338 = vsel %vm330, %v193, 0
    %v341 = vsel %vm330, %v194, 0
    %v344 = vsel %vm330, %v195, 0
    %v347 = vsel %vm330, %v196, 0
    %v350 = vsel %vm330, %v197, 0
    %v353 = vsel %vm330, %v198, 0
    %355 = vmatprep.subr.bf16.mxu0 %v327
    %356 = vmatpush1.bf16.msra.mxu0 %v326
    %357 = vmatprep.subr.bf16.mxu0 0
    %358 = vmatpush1.bf16.msra.mxu0 0
    %359 = vmatprep.subr.bf16.mxu0 0
    %360 = vmatpush1.bf16.msra.mxu0 0
    %361 = vmatprep.subr.bf16.mxu0 0
    %362 = vmatpush1.bf16.msra.mxu0 0
    %363 = vmatprep.subr.bf16.mxu0 0
    %364 = vmatpush1.bf16.msra.mxu0 0
    %365 = vmatprep.subr.bf16.mxu0 0
    %366 = vmatpush1.bf16.msra.mxu0 0
    %367 = vmatprep.subr.bf16.mxu0 0
    %368 = vmatpush1.bf16.msra.mxu0 0
    %369 = vmatprep.subr.bf16.mxu0 0
    %370 = vmatpush1.bf16.msra.mxu0 0
    %371 = vmatprep.subr.bf16.mxu0 0
    %372 = vmatpush1.bf16.msra.mxu0 0
    %373 = vmatprep.subr.bf16.mxu0 0
    %374 = vmatpush1.bf16.msra.mxu0 0
    %375 = vmatprep.subr.bf16.mxu0 0
    %376 = vmatpush1.bf16.msra.mxu0 0
    %377 = vmatprep.subr.bf16.mxu0 0
    %378 = vmatpush1.bf16.msra.mxu0 0
    %379 = vmatprep.subr.bf16.mxu0 0
    %380 = vmatpush1.bf16.msra.mxu0 0
    %381 = vmatprep.subr.bf16.mxu0 0
    %382 = vmatpush1.bf16.msra.mxu0 0
    %383 = vmatprep.subr.bf16.mxu0 0
    %384 = vmatpush1.bf16.msra.mxu0 0
    %385 = vmatprep.subr.bf16.mxu0 0
    %386 = vmatpush1.bf16.msra.mxu0 0
    %387 = vmatprep.mubr.bf16.mxu0 0
    %388 = vmatmul.mubr.bf16.gmra.mrb[0].mxu0 %v332
    %v389 = vpop.f32.mrb[0].mxu0
    %v390 = vadd.f32 %v243, %v389
    %v391 = vpop.f32.mrb[0].mxu0
    %v392 = vadd.f32 %v243, %v391
    %v393 = vpop.f32.mrb[0].mxu0
    %v394 = vadd.f32 %v248, %v393
    %v395 = vpop.f32.mrb[0].mxu0
    %v396 = vadd.f32 %v248, %v395
    %397 = vmatprep.mubr.bf16.mxu0 0
    %398 = vmatmul.mubr.bf16.gmra.mrb[0].mxu0 %v335
    %v399 = vpop.f32.mrb[0].mxu0
    %v400 = vadd.f32 %v253, %v399
    %v401 = vpop.f32.mrb[0].mxu0
    %v402 = vadd.f32 %v253, %v401
    %v403 = vpop.f32.mrb[0].mxu0
    %v404 = vadd.f32 %v258, %v403
    %v405 = vpop.f32.mrb[0].mxu0
    %v406 = vadd.f32 %v258, %v405
    %407 = vmatprep.mubr.bf16.mxu0 0
    %408 = vmatmul.mubr.bf16.gmra.mrb[0].mxu0 %v338
    %v409 = vpop.f32.mrb[0].mxu0
    %v410 = vadd.f32 %v263, %v409
    %v411 = vpop.f32.mrb[0].mxu0
    %v412 = vadd.f32 %v263, %v411
    %v413 = vpop.f32.mrb[0].mxu0
    %v414 = vadd.f32 %v268, %v413
    %v415 = vpop.f32.mrb[0].mxu0
    %v416 = vadd.f32 %v268, %v415
    %417 = vmatprep.mubr.bf16.mxu0 0
    %418 = vmatmul.mubr.bf16.gmra.mrb[0].mxu0 %v341
    %v419 = vpop.f32.mrb[0].mxu0
    %v420 = vadd.f32 %v273, %v419
    %v421 = vpop.f32.mrb[0].mxu0
    %v422 = vadd.f32 %v273, %v421
    %v423 = vpop.f32.mrb[0].mxu0
    %v424 = vadd.f32 %v278, %v423
    %v425 = vpop.f32.mrb[0].mxu0
    %v426 = vadd.f32 %v278, %v425
    %427 = vmatprep.mubr.bf16.mxu0 0
    %428 = vmatmul.mubr.bf16.gmra.mrb[0].mxu0 %v344
    %v429 = vpop.f32.mrb[0].mxu0
    %v430 = vadd.f32 %v283, %v429
    %v431 = vpop.f32.mrb[0].mxu0
    %v432 = vadd.f32 %v283, %v431
    %v433 = vpop.f32.mrb[0].mxu0
    %v434 = vadd.f32 %v288, %v433
    %v435 = vpop.f32.mrb[0].mxu0
    %v436 = vadd.f32 %v288, %v435
    %437 = vmatprep.mubr.bf16.mxu0 0
    %438 = vmatmul.mubr.bf16.gmra.mrb[0].mxu0 %v347
    %v439 = vpop.f32.mrb[0].mxu0
    %v440 = vadd.f32 %v293, %v439
    %v441 = vpop.f32.mrb[0].mxu0
    %v442 = vadd.f32 %v293, %v441
    %v443 = vpop.f32.mrb[0].mxu0
    %v444 = vadd.f32 %v298, %v443
    %v445 = vpop.f32.mrb[0].mxu0
    %v446 = vadd.f32 %v298, %v445
    %447 = vmatprep.mubr.bf16.mxu0 0
    %448 = vmatmul.mubr.bf16.gmra.mrb[0].mxu0 %v350
    %v449 = vpop.f32.mrb[0].mxu0
    %v450 = vadd.f32 %v303, %v449
    %v451 = vpop.f32.mrb[0].mxu0
    %v452 = vadd.f32 %v303, %v451
    %v453 = vpop.f32.mrb[0].mxu0
    %v454 = vadd.f32 %v308, %v453
    %v455 = vpop.f32.mrb[0].mxu0
    %v456 = vadd.f32 %v308, %v455
    %457 = vmatprep.mubr.bf16.mxu0 0
    %458 = vmatmul.mubr.bf16.gmra.mrb[0].mxu0 %v353
    %v459 = vpop.f32.mrb[0].mxu0
    %v460 = vadd.f32 %v313, %v459
    %v461 = vpop.f32.mrb[0].mxu0
    %v462 = vadd.f32 %v313, %v461
    %v463 = vpop.f32.mrb[0].mxu0
    %v464 = vadd.f32 %v318, %v463
    %v465 = vpop.f32.mrb[0].mxu0
    %v466 = vadd.f32 %v318, %v465
    %467 = vdwg.mxu0
    %v468 = vmax.f32 %v390, 0.0
    %v469 = vmax.f32 %v392, 0.0
    %v470 = vmax.f32 %v394, 0.0
    %v471 = vmax.f32 %v396, 0.0
    %v472 = vmax.f32 %v400, 0.0
    %v473 = vmax.f32 %v402, 0.0
    %v474 = vmax.f32 %v404, 0.0
    %v475 = vmax.f32 %v406, 0.0
    %v476 = vmax.f32 %v410, 0.0
    %v477 = vmax.f32 %v412, 0.0
    %v478 = vmax.f32 %v414, 0.0
    %v479 = vmax.f32 %v416, 0.0
    %v480 = vmax.f32 %v420, 0.0
    %v481 = vmax.f32 %v422, 0.0
    %v482 = vmax.f32 %v424, 0.0
    %v483 = vmax.f32 %v426, 0.0
    %v484 = vmax.f32 %v430, 0.0
    %v485 = vmax.f32 %v432, 0.0
    %v486 = vmax.f32 %v434, 0.0
    %v487 = vmax.f32 %v436, 0.0
    %v488 = vmax.f32 %v440, 0.0
    %v489 = vmax.f32 %v442, 0.0
    %v490 = vmax.f32 %v444, 0.0
    %v491 = vmax.f32 %v446, 0.0
    %v492 = vmax.f32 %v450, 0.0
    %v493 = vmax.f32 %v452, 0.0
    %v494 = vmax.f32 %v454, 0.0
    %v495 = vmax.f32 %v456, 0.0
    %v496 = vmax.f32 %v460, 0.0
    %v497 = vmax.f32 %v462, 0.0
    %v498 = vmax.f32 %v464, 0.0
    %v499 = vmax.f32 %v466, 0.0
    %v500 = vpack.c.bf16 %v470, %v468
    %v501 = vpack.c.bf16 %v471, %v469
    %v502 = vpack.c.bf16 %v474, %v472
    %v503 = vpack.c.bf16 %v475, %v473
    %v504 = vpack.c.bf16 %v478, %v476
    %v505 = vpack.c.bf16 %v479, %v477
    %v506 = vpack.c.bf16 %v482, %v480
    %v507 = vpack.c.bf16 %v483, %v481
    %v508 = vpack.c.bf16 %v486, %v484
    %v509 = vpack.c.bf16 %v487, %v485
    %v510 = vpack.c.bf16 %v490, %v488
    %v511 = vpack.c.bf16 %v491, %v489
    %v512 = vpack.c.bf16 %v494, %v492
    %v513 = vpack.c.bf16 %v495, %v493
    %v514 = vpack.c.bf16 %v498, %v496
    %v515 = vpack.c.bf16 %v499, %v497
    %517 = vset.pattern.permute.xlu0 0
    %518 = vperm.xlu0 %517, %v219
    %v519 = vpop.permute.xlu0 %518
    %522 = vset.pattern.permute.xlu0 0
    %523 = vperm.xlu0 %522, %v220
    %v524 = vpop.permute.xlu0 %523
    %527 = vset.pattern.permute.xlu0 0
    %528 = vperm.xlu0 %527, %v221
    %v529 = vpop.permute.xlu0 %528
    %532 = vset.pattern.permute.xlu0 0
    %533 = vperm.xlu0 %532, %v222
    %v534 = vpop.permute.xlu0 %533
    %537 = vset.pattern.permute.xlu0 0
    %538 = vperm.xlu0 %537, %v223
    %v539 = vpop.permute.xlu0 %538
    %542 = vset.pattern.permute.xlu0 0
    %543 = vperm.xlu0 %542, %v224
    %v544 = vpop.permute.xlu0 %543
    %547 = vset.pattern.permute.xlu0 0
    %548 = vperm.xlu0 %547, %v225
    %v549 = vpop.permute.xlu0 %548
    %552 = vset.pattern.permute.xlu0 0
    %553 = vperm.xlu0 %552, %v226
    %v554 = vpop.permute.xlu0 %553
    %556 = vmatprep.subr.bf16.mxu0 %v501
    %557 = vmatpush1.bf16.msra.mxu0 %v500
    %558 = vmatprep.subr.bf16.mxu0 %v503
    %559 = vmatpush1.bf16.msra.mxu0 %v502
    %560 = vmatprep.subr.bf16.mxu0 %v505
    %561 = vmatpush1.bf16.msra.mxu0 %v504
    %562 = vmatprep.subr.bf16.mxu0 %v507
    %563 = vmatpush1.bf16.msra.mxu0 %v506
    %564 = vmatprep.subr.bf16.mxu0 %v509
    %565 = vmatpush1.bf16.msra.mxu0 %v508
    %566 = vmatprep.subr.bf16.mxu0 %v511
    %567 = vmatpush1.bf16.msra.mxu0 %v510
    %568 = vmatprep.subr.bf16.mxu0 %v513
    %569 = vmatpush1.bf16.msra.mxu0 %v512
    %570 = vmatprep.subr.bf16.mxu0 %v515
    %571 = vmatpush1.bf16.msra.mxu0 %v514
    %572 = vmatprep.subr.bf16.mxu0 0
    %573 = vmatpush1.bf16.msra.mxu0 0
    %574 = vmatprep.subr.bf16.mxu0 0
    %575 = vmatpush1.bf16.msra.mxu0 0
    %576 = vmatprep.subr.bf16.mxu0 0
    %577 = vmatpush1.bf16.msra.mxu0 0
    %578 = vmatprep.subr.bf16.mxu0 0
    %579 = vmatpush1.bf16.msra.mxu0 0
    %580 = vmatprep.subr.bf16.mxu0 0
    %581 = vmatpush1.bf16.msra.mxu0 0
    %582 = vmatprep.subr.bf16.mxu0 0
    %583 = vmatpush1.bf16.msra.mxu0 0
    %584 = vmatprep.subr.bf16.mxu0 0
    %585 = vmatpush1.bf16.msra.mxu0 0
    %586 = vmatprep.subr.bf16.mxu0 0
    %587 = vmatpush1.bf16.msra.mxu0 0
    %588 = vmatprep.mubr.bf16.mxu0 0
    %589 = vmatmul.mubr.bf16.gmra.mrb[0].mxu0 %v215
    %v590 = vpop.f32.mrb[0].mxu0
    %v591 = vadd.f32 %v519, %v590
    %v592 = vpop.f32.mrb[0].mxu0
    %v593 = vadd.f32 %v519, %v592
    %v594 = vpop.f32.mrb[0].mxu0
    %v595 = vadd.f32 %v524, %v594
    %v596 = vpop.f32.mrb[0].mxu0
    %v597 = vadd.f32 %v524, %v596
    %598 = vmatprep.mubr.bf16.mxu0 0
    %599 = vmatmul.mubr.bf16.gmra.mrb[0].mxu0 %v216
    %v600 = vpop.f32.mrb[0].mxu0
    %v601 = vadd.f32 %v529, %v600
    %v602 = vpop.f32.mrb[0].mxu0
    %v603 = vadd.f32 %v529, %v602
    %v604 = vpop.f32.mrb[0].mxu0
    %v605 = vadd.f32 %v534, %v604
    %v606 = vpop.f32.mrb[0].mxu0
    %v607 = vadd.f32 %v534, %v606
    %608 = vmatprep.mubr.bf16.mxu0 0
    %609 = vmatmul.mubr.bf16.gmra.mrb[0].mxu0 %v217
    %v610 = vpop.f32.mrb[0].mxu0
    %v611 = vadd.f32 %v539, %v610
    %v612 = vpop.f32.mrb[0].mxu0
    %v613 = vadd.f32 %v539, %v612
    %v614 = vpop.f32.mrb[0].mxu0
    %v615 = vadd.f32 %v544, %v614
    %v616 = vpop.f32.mrb[0].mxu0
    %v617 = vadd.f32 %v544, %v616
    %618 = vmatprep.mubr.bf16.mxu0 0
    %619 = vmatmul.mubr.bf16.gmra.mrb[0].mxu0 %v218
    %v620 = vpop.f32.mrb[0].mxu0
    %v621 = vadd.f32 %v549, %v620
    %v622 = vpop.f32.mrb[0].mxu0
    %v623 = vadd.f32 %v549, %v622
    %v624 = vpop.f32.mrb[0].mxu0
    %v625 = vadd.f32 %v554, %v624
    %v626 = vpop.f32.mrb[0].mxu0
    %v627 = vadd.f32 %v554, %v626
    %628 = vdwg.mxu0
    %v629 = vmax.f32 %v591, 0.0
    %v630 = vmax.f32 %v593, 0.0
    %v631 = vmax.f32 %v595, 0.0
    %v632 = vmax.f32 %v597, 0.0
    %v633 = vmax.f32 %v601, 0.0
    %v634 = vmax.f32 %v603, 0.0
    %v635 = vmax.f32 %v605, 0.0
    %v636 = vmax.f32 %v607, 0.0
    %v637 = vmax.f32 %v611, 0.0
    %v638 = vmax.f32 %v613, 0.0
    %v639 = vmax.f32 %v615, 0.0
    %v640 = vmax.f32 %v617, 0.0
    %v641 = vmax.f32 %v621, 0.0
    %v642 = vmax.f32 %v623, 0.0
    %v643 = vmax.f32 %v625, 0.0
    %v644 = vmax.f32 %v627, 0.0
    %v645 = vpack.c.bf16 %v631, %v629
    %v646 = vpack.c.bf16 %v632, %v630
    %v647 = vpack.c.bf16 %v635, %v633
    %v648 = vpack.c.bf16 %v636, %v634
    %v649 = vpack.c.bf16 %v639, %v637
    %v650 = vpack.c.bf16 %v640, %v638
    %v651 = vpack.c.bf16 %v643, %v641
    %v652 = vpack.c.bf16 %v644, %v642
    %654 = vset.pattern.permute.xlu0 0
    %655 = vperm.xlu0 %654, %v229
    %v656 = vpop.permute.xlu0 %655
    %659 = vset.pattern.permute.xlu0 0
    %660 = vperm.xlu0 %659, %v230
    %v661 = vpop.permute.xlu0 %660
    %664 = vset.pattern.permute.xlu0 0
    %665 = vperm.xlu0 %664, %v231
    %v666 = vpop.permute.xlu0 %665
    %669 = vset.pattern.permute.xlu0 0
    %670 = vperm.xlu0 %669, %v232
    %v671 = vpop.permute.xlu0 %670
    %vm673 = vcmask 523264
    %v675 = vsel %vm673, %v227, 0
    %v678 = vsel %vm673, %v228, 0
    %680 = vmatprep.subr.bf16.mxu0 %v646
    %681 = vmatpush1.bf16.msra.mxu0 %v645
    %682 = vmatprep.subr.bf16.mxu0 %v648
    %683 = vmatpush1.bf16.msra.mxu0 %v647
    %684 = vmatprep.subr.bf16.mxu0 %v650
    %685 = vmatpush1.bf16.msra.mxu0 %v649
    %686 = vmatprep.subr.bf16.mxu0 %v652
    %687 = vmatpush1.bf16.msra.mxu0 %v651
    %688 = vmatprep.subr.bf16.mxu0 0
    %689 = vmatpush1.bf16.msra.mxu0 0
    %690 = vmatprep.subr.bf16.mxu0 0
    %691 = vmatpush1.bf16.msra.mxu0 0
    %692 = vmatprep.subr.bf16.mxu0 0
    %693 = vmatpush1.bf16.msra.mxu0 0
    %694 = vmatprep.subr.bf16.mxu0 0
    %695 = vmatpush1.bf16.msra.mxu0 0
    %696 = vmatprep.subr.bf16.mxu0 0
    %697 = vmatpush1.bf16.msra.mxu0 0
    %698 = vmatprep.subr.bf16.mxu0 0
    %699 = vmatpush1.bf16.msra.mxu0 0
    %700 = vmatprep.subr.bf16.mxu0 0
    %701 = vmatpush1.bf16.msra.mxu0 0
    %702 = vmatprep.subr.bf16.mxu0 0
    %703 = vmatpush1.bf16.msra.mxu0 0
    %704 = vmatprep.subr.bf16.mxu0 0
    %705 = vmatpush1.bf16.msra.mxu0 0
    %706 = vmatprep.subr.bf16.mxu0 0
    %707 = vmatpush1.bf16.msra.mxu0 0
    %708 = vmatprep.subr.bf16.mxu0 0
    %709 = vmatpush1.bf16.msra.mxu0 0
    %710 = vmatprep.subr.bf16.mxu0 0
    %711 = vmatpush1.bf16.msra.mxu0 0
    %712 = vmatprep.mubr.bf16.mxu0 0
    %713 = vmatmul.mubr.bf16.gmra.mrb[0].mxu0 %v675
    %v714 = vpop.f32.mrb[0].mxu0
    %v715 = vadd.f32 %v656, %v714
    %v716 = vpop.f32.mrb[0].mxu0
    %v717 = vadd.f32 %v656, %v716
    %v718 = vpop.f32.mrb[0].mxu0
    %v719 = vadd.f32 %v661, %v718
    %v720 = vpop.f32.mrb[0].mxu0
    %v721 = vadd.f32 %v661, %v720
    %722 = vmatprep.mubr.bf16.mxu0 0
    %723 = vmatmul.mubr.bf16.gmra.mrb[0].mxu0 %v678
    %v724 = vpop.f32.mrb[0].mxu0
    %v725 = vadd.f32 %v666, %v724
    %v726 = vpop.f32.mrb[0].mxu0
    %v727 = vadd.f32 %v666, %v726
    %v728 = vpop.f32.mrb[0].mxu0
    %v729 = vadd.f32 %v671, %v728
    %v730 = vpop.f32.mrb[0].mxu0
    %v731 = vadd.f32 %v671, %v730
    %732 = vdwg.mxu0
    %v733 = vmax.f32 %v715, 0.0
    %v734 = vmax.f32 %v717, 0.0
    %v735 = vmax.f32 %v719, 0.0
    %v736 = vmax.f32 %v721, 0.0
    %v737 = vmax.f32 %v725, 0.0
    %v738 = vmax.f32 %v727, 0.0
    %v739 = vmax.f32 %v729, 0.0
    %v740 = vmax.f32 %v731, 0.0
    %742 = vset.pattern.permute.xlu0 0
    %743 = vperm.xlu0 %742, %v233
    %v744 = vpop.permute.xlu0 %743
    %747 = vset.pattern.permute.xlu0 0
    %748 = vperm.xlu0 %747, %v234
    %v749 = vpop.permute.xlu0 %748
    %752 = vset.pattern.permute.xlu0 0
    %753 = vperm.xlu0 %752, %v235
    %v754 = vpop.permute.xlu0 %753
    %757 = vset.pattern.permute.xlu0 0
    %758 = vperm.xlu0 %757, %v236
    %v759 = vpop.permute.xlu0 %758
    %v761 = vmul.f32 %v733, %v744
    %v762 = vmul.f32 %v734, %v744
    %v763 = vmul.f32 %v735, %v749
    %v764 = vmul.f32 %v736, %v749
    %v765 = vmul.f32 %v737, %v754
    %v766 = vmul.f32 %v738, %v754
    %v767 = vmul.f32 %v739, %v759
    %v768 = vmul.f32 %v740, %v759
    %v769 = vadd.f32 %v761, %v763
    %v770 = vadd.f32 %v769, %v765
    %v771 = vadd.f32 %v770, %v767
    %v772 = vrot.slane %v771, 4
    %v773 = vadd.f32 %v771, %v772
    %v774 = vrot.slane %v773, 2
    %v775 = vadd.f32 %v773, %v774
    %v776 = vrot.slane %v775, 1
    %v777 = vadd.f32 %v775, %v776
    %v778 = vadd.f32 %v762, %v764
    %v779 = vadd.f32 %v778, %v766
    %v780 = vadd.f32 %v779, %v768
    %v781 = vrot.slane %v780, 4
    %v782 = vadd.f32 %v780, %v781
    %v783 = vrot.slane %v782, 2
    %v784 = vadd.f32 %v782, %v783
    %v785 = vrot.slane %v784, 1
    %v786 = vadd.f32 %v784, %v785
    %788 = vset.pattern.permute.xlu0 0
    %789 = vperm.xlu0 %788, %v237
    %v790 = vpop.permute.xlu0 %789
    %v792 = vlaneseq
    %v793 = vshrl.u32 %v792, 7
    %v794 = vsub.s32 0, %v793
    %v795 = vrot.slane %v790, %v794
    %v796 = vadd.f32 %v777, %v795
    %v797 = vadd.f32 %v786, %v795
    %v800 = vcombine.low %v796, %v797
    %v802 = vunpack.c.l.s4 1966171168
    %v803 = vunpack.c.0.s8 %v802
    %v804 = vlaneseq
    %v805 = vshrl.u32 %v804, 7
    %v806 = vsub.s32 %v803, %v805
    %v807 = vrot.slane %v800, %v806
    %v809 = vunpack.c.l.s4 1966171168
    %v810 = vunpack.c.0.s8 %v809
    %v811 = vlaneseq
    %v812 = vshrl.u32 %v811, 7
    %v813 = vsub.s32 %v810, %v812
    %v814 = vrot.slane %v807, %v813
    %v816 = vlaneseq
    %vm817 = vcmp.ge.s32.totalorder %v816, 0
    %vm818 = vcmp.lt.s32.totalorder %v816, 256
    %vm819 = vmand %vm817, %vm818
    %820 = vst.msk [vmem:[%s10] sm:$0x3] %vm819, %v814
    // Predicated region
    $region62: #{_lambda_.2} parent=1 // pred_check
      _
    $region63: #{_lambda_.2} parent=1 // pred_check_branch
      %822 = sbr.rel (0) target = $region65
    $region64: #{_lambda_.2} parent=1 // pred_region
      _
    $region65: #{_lambda_.2} parent=1 // pred_fallthru
      _
    // Predicated region
    $region66: #{_lambda_.2} parent=1 // pred_check
      _
    $region67: #{_lambda_.2} parent=1 // pred_check_branch
      %824 = sbr.rel (0) target = $region69
    $region68: #{_lambda_.2} parent=1 // pred_region
      _
    $region69: #{_lambda_.2} parent=1 // pred_fallthru
      _
    %825 = vsyncpa [#allocation9], 1
    %826 = vsyncpa [#allocation11], 1
    %827 = vsyncpa [#allocation14], 1
    %828 = vsyncpa [#allocation17], 1

</llo_original>
